<compile_context>
chip_gen: v6e
topology: v6e:2x2x1
jax: 0.10.0
libtpu: 0.0.40
codegen_flags: <defaults>
</compile_context>

<pallas_src>
import functools

import jax
import jax.numpy as jnp
from jax.experimental import pallas as pl
from jax.experimental.pallas import tpu as pltpu

_LANES = 128
_SUBLANES = 8
_KWAY = 8                          # independent accumulator chains per block
_ROW_QUANT = _SUBLANES * _KWAY     # 64: also a legal sublane multiple for bf16/int8
_MAX_TILE_ROWS = 8192              # keeps block + temporaries inside v7x's 64 MiB VMEM


def _round_up(x, m):
    return ((x + m - 1) // m) * m


def _mae_partial_kernel(gt_ref, pred_ref, out_ref, *, rows_total, tile_rows, mask_tail):
    """Sum of |gt - pred| over one (tile_rows, 128) tile -> (8, 128) partial sum."""
    diff = jnp.abs(gt_ref[...].astype(jnp.float32) - pred_ref[...].astype(jnp.float32))
    if mask_tail:
        # Rows past `rows_total` only exist in the (partial) last grid block and
        # contain unspecified data; zero them.  `limit` is a scalar, so this is
        # one iota + one compare + one select of pure VPU work, and it is only
        # compiled in when the static row count is ragged.
        limit = rows_total - pl.program_id(0) * tile_rows
        row = jax.lax.broadcasted_iota(jnp.int32, diff.shape, 0)
        diff = jnp.where(row < limit, diff, 0.0)
    # K-way accumulation: K independent vreg accumulator chains (ILP on the
    # VALU), then combine the K partials.  Reshape stays on (8, 128) vreg
    # boundaries, so it is layout-free.
    d = diff.reshape(tile_rows // (_KWAY * _SUBLANES), _KWAY, _SUBLANES, _LANES)
    out_ref[...] = jnp.sum(jnp.sum(d, axis=0), axis=0)


def unit_mae_loss(gt_matrix, final_gln_matrix, *, tile_rows=_MAX_TILE_ROWS):
    """Mean absolute error between two same-shape tensors (UnitMAELoss.forward)."""
    assert gt_matrix.shape == final_gln_matrix.shape, (gt_matrix.shape, final_gln_matrix.shape)
    total = gt_matrix.size
    assert total > 0

    if gt_matrix.dtype != final_gln_matrix.dtype:
        ct = jnp.promote_types(gt_matrix.dtype, final_gln_matrix.dtype)
        gt_matrix = gt_matrix.astype(ct)
        final_gln_matrix = final_gln_matrix.astype(ct)
    itemsize = jnp.dtype(gt_matrix.dtype).itemsize

    n = total
    rem = n % _LANES
    if rem == 0:
        rows = n // _LANES
        gt2 = gt_matrix.reshape(rows, _LANES)
        pr2 = final_gln_matrix.reshape(rows, _LANES)
    else:
        # Ragged lane tail: pad BOTH inputs identically with < 128 zeros.
        # This is the only case with an extra copy pass; lane-aligned sizes go
        # straight through with zero wrapper-side data movement.
        pad = _LANES - rem
        gt2 = jnp.pad(gt_matrix.reshape(-1), (0, pad)).reshape(-1, _LANES)
        pr2 = jnp.pad(final_gln_matrix.reshape(-1), (0, pad)).reshape(-1, _LANES)
        rows = gt2.shape[0]

    # Tile rows: multiple of 64 (8 sublanes x 8 accumulator chains; also covers
    # the bf16/int8 minimum sublane tiling), clamped to the VMEM-safe maximum.
    tr = min(int(tile_rows), _MAX_TILE_ROWS, _round_up(rows, _ROW_QUANT))
    tr = max(_ROW_QUANT, _round_up(tr, _ROW_QUANT))

    num_blocks = pl.cdiv(rows, tr)
    mask_tail = (rows % tr) != 0

    kernel = functools.partial(
        _mae_partial_kernel, rows_total=rows, tile_rows=tr, mask_tail=mask_tail)

    cost = pl.CostEstimate(
        flops=3 * total,
        transcendentals=0,
        bytes_accessed=2 * total * itemsize + num_blocks * _SUBLANES * _LANES * 4,
    )

    partials = pl.pallas_call(
        kernel,
        out_shape=jax.ShapeDtypeStruct((num_blocks * _SUBLANES, _LANES), jnp.float32),
        grid_spec=pltpu.PrefetchScalarGridSpec(
            num_scalar_prefetch=0,
            grid=(num_blocks,),
            in_specs=[
                pl.BlockSpec((tr, _LANES), lambda i: (i, 0)),
                pl.BlockSpec((tr, _LANES), lambda i: (i, 0)),
            ],
            out_specs=pl.BlockSpec((_SUBLANES, _LANES), lambda i: (i, 0)),
        ),
        compiler_params=pltpu.CompilerParams(
            # Each step writes its own independent partial-sum block, so the
            # axis is truly parallel (v7x shards it across both TensorCores).
            dimension_semantics=("parallel",),
            # 16 MiB double-buffered inputs (f32, tr=8192) + in-kernel f32
            # temporaries; 48 MiB stays inside v7x's 64 MiB physical VMEM and
            # lifts v5e's 16 MiB / v6e's 32 MiB default scoped limits.
            vmem_limit_bytes=48 * 1024 * 1024,
        ),
        cost_estimate=cost,
    )(gt2, pr2)

    # Tiny final cross-lane reduce + mean in plain JAX (outside the hot loop).
    return jnp.sum(partials) * (1.0 / float(total))


if __name__ == "__main__":
    key = jax.random.PRNGKey(0)
    k1, k2, k3, k4, k5, k6 = jax.random.split(key, 6)

    # Lane-aligned case (no padding, no masking): batched GLN matrices.
    gt = jax.random.normal(k1, (2, 64, 128), dtype=jnp.float32)
    pr = jax.random.normal(k2, (2, 64, 128), dtype=jnp.float32)
    mae = jax.block_until_ready(unit_mae_loss(gt, pr))
    ref = jnp.mean(jnp.abs(gt - pr))
    assert jnp.allclose(mae, ref, rtol=1e-5, atol=1e-6), (mae, ref)

    # Ragged size + small tile -> multiple grid blocks + in-kernel tail mask.
    gt_odd = jax.random.normal(k3, (3, 71, 53), dtype=jnp.float32)
    pr_odd = jax.random.normal(k4, (3, 71, 53), dtype=jnp.float32)
    mae_odd = jax.block_until_ready(unit_mae_loss(gt_odd, pr_odd, tile_rows=64))
    ref_odd = jnp.mean(jnp.abs(gt_odd - pr_odd))
    assert jnp.allclose(mae_odd, ref_odd, rtol=1e-5, atol=1e-6), (mae_odd, ref_odd)

    # bf16 inputs (sublane tiling >= 16 is covered by the 64-row tile quantum).
    gt_bf = jax.random.normal(k5, (2, 32, 48), dtype=jnp.bfloat16)
    pr_bf = jax.random.normal(k6, (2, 32, 48), dtype=jnp.bfloat16)
    mae_bf = jax.block_until_ready(unit_mae_loss(gt_bf, pr_bf))
    ref_bf = jnp.mean(jnp.abs(gt_bf.astype(jnp.float32) - pr_bf.astype(jnp.float32)))
    assert jnp.allclose(mae_bf, ref_bf, rtol=1e-4, atol=1e-5), (mae_bf, ref_bf)

    print("KERNEL_OK")
</pallas_src>

<mosaic_0001>
module attributes {stable_mosaic.version = 11 : i64} {
  func.func @_mae_partial_kernel(%arg0: i32, %arg1: memref<128x128xf32, #tpu.memory_space<vmem>>, %arg2: memref<128x128xf32, #tpu.memory_space<vmem>>, %arg3: memref<8x128xf32, #tpu.memory_space<vmem>>) attributes {dimension_semantics = [#tpu.dimension_semantics<parallel>], iteration_bounds = array<i64: 1>, scalar_prefetch = 0 : i64, scratch_operands = 0 : i64, tpu.core_type = #tpu.core_type<tc>, window_params = [{transform_indices = @transform_0, window_bounds = array<i64: 128, 128>}, {transform_indices = @transform_1, window_bounds = array<i64: 128, 128>}, {transform_indices = @transform_2, window_bounds = array<i64: 8, 128>}]} {
    %c0 = arith.constant 0 : index
    %c0_0 = arith.constant 0 : index
    %0 = vector.load %arg1[%c0, %c0_0] : memref<128x128xf32, #tpu.memory_space<vmem>>, vector<128x128xf32>
    %c0_1 = arith.constant 0 : index
    %c0_2 = arith.constant 0 : index
    %1 = vector.load %arg2[%c0_1, %c0_2] : memref<128x128xf32, #tpu.memory_space<vmem>>, vector<128x128xf32>
    %2 = arith.subf %0, %1 : vector<128x128xf32>
    %3 = math.absf %2 : vector<128x128xf32>
    %4 = vector.shape_cast %3 : vector<128x128xf32> to vector<2x8x8x128xf32>
    %cst = arith.constant dense<0.000000e+00> : vector<8x8x128xf32>
    %5 = vector.multi_reduction <add>, %4, %cst [0] : vector<2x8x8x128xf32> to vector<8x8x128xf32>
    %cst_3 = arith.constant dense<0.000000e+00> : vector<8x128xf32>
    %6 = vector.multi_reduction <add>, %5, %cst_3 [0] : vector<8x8x128xf32> to vector<8x128xf32>
    %c0_4 = arith.constant 0 : index
    %c0_5 = arith.constant 0 : index
    %7 = vector.load %arg3[%c0_4, %c0_5] : memref<8x128xf32, #tpu.memory_space<vmem>>, vector<8x128xf32>
    tpu.vector_store %arg3[%c0_4, %c0_5], %6 {strides = array<i32>} : memref<8x128xf32, #tpu.memory_space<vmem>>, vector<8x128xf32>,
    return
  }
  func.func @transform_0(%arg0: i32) -> (i32, i32) {
    %c0_i32 = arith.constant 0 : i32
    %c0_i32_0 = arith.constant 0 : i32
    return %arg0, %c0_i32 : i32, i32
  }
  func.func @transform_1(%arg0: i32) -> (i32, i32) {
    %c0_i32 = arith.constant 0 : i32
    %c0_i32_0 = arith.constant 0 : i32
    return %arg0, %c0_i32 : i32, i32
  }
  func.func @transform_2(%arg0: i32) -> (i32, i32) {
    %c0_i32 = arith.constant 0 : i32
    %c0_i32_0 = arith.constant 0 : i32
    return %arg0, %c0_i32 : i32, i32
  }
}

</mosaic_0001>

<llo_original>
// kernel: tpu_custom_call.1
$region0: #{tpu_custom_call.1}
  #allocation0 [shape = 'u32[]', space=smem, size = 0x4, offset = 0x4, fixed_abs, tag = 'smem constant byte address 0x4 - core index']
  #allocation1 [shape = 'u32[144,128]{1,0:T(1,128)}', space=vmem, size = 0x12000, scoped, tag = 'internal scratch']
  %s0 = inlined_call_operand.hbm [shape: f32[128,128], index: 0, kind: input, shape index: {}]
  %s1 = inlined_call_operand.hbm [shape: f32[128,128], index: 1, kind: input, shape index: {}]
  %s2 = inlined_call_operand.hbm [shape: f32[8,128], index: 2, kind: output, shape index: {}]
  %s3 = sld [smem:[#allocation0]]
  $region26: #{tpu_custom_call.1} parent=0
    _
  %s5 = ssub.s32 1, %s3
  %s6 = scalar_select 0, %s5, %s3
  $region1: #{tpu_custom_call.1} parent=0
    #allocation2 [shape = 'u8[65536]{0}', space=vmem, size = 0x10000, scoped, tag = 'input window, operand 0, single buffered']
    #allocation3 [shape = 's32[1]{0}', space=sflag, size = 0x4, scoped, tag = 'scoped memory for tpu_custom_call.1']
    #allocation4 [shape = 's32[1]{0}', space=sflag, size = 0x4, scoped, tag = 'scoped memory for tpu_custom_call.1']
    #allocation5 [shape = 'u8[65536]{0}', space=vmem, size = 0x10000, scoped, tag = 'input window, operand 1, single buffered']
    #allocation6 [shape = 's32[1]{0}', space=sflag, size = 0x4, scoped, tag = 'scoped memory for tpu_custom_call.1']
    #allocation7 [shape = 'u8[4096]{0}', space=vmem, size = 0x1000, scoped, tag = 'output window, operand 0, single buffered']
    %7 = vsyncpa [#allocation3], 0
    %8 = vsyncpa [#allocation6], 0
    %9 = vsyncpa [#allocation4], 0
    // Predicated region
    $region2: #{tpu_custom_call.1} parent=1 // pred_check
      _
    $region3: #{tpu_custom_call.1} parent=1 // pred_check_branch
      %11 = sbr.rel (0) target = $region5
    $region4: #{tpu_custom_call.1} parent=1 // pred_region
      %s13 = ssub.s32 2048, 2048
      %14 = vsyncadd [#allocation3], %s13
      %s15 = sshll.u32 [#allocation2], 4
      %s16 = int_to_ptr.vmem [resolvable:$true] %s15
      %21 = dma.hbm_to_vmem [thread:$0]  %s0, 2048, %s16, [#allocation3], 128, 128, 8
    $region5: #{tpu_custom_call.1} parent=1 // pred_fallthru
      _
    // Predicated region
    $region6: #{tpu_custom_call.1} parent=1 // pred_check
      _
    $region7: #{tpu_custom_call.1} parent=1 // pred_check_branch
      %23 = sbr.rel (0) target = $region9
    $region8: #{tpu_custom_call.1} parent=1 // pred_region
      %s25 = ssub.s32 2048, 2048
      %26 = vsyncadd [#allocation6], %s25
      %s27 = sshll.u32 [#allocation5], 4
      %s28 = int_to_ptr.vmem [resolvable:$true] %s27
      %33 = dma.hbm_to_vmem [thread:$0]  %s1, 2048, %s28, [#allocation6], 128, 128, 8
    $region9: #{tpu_custom_call.1} parent=1 // pred_fallthru
      _
    // Predicated region
    $region10: #{tpu_custom_call.1} parent=1 // pred_check
      _
    $region11: #{tpu_custom_call.1} parent=1 // pred_check_branch
      %35 = sbr.rel (0) target = $region13
    $region12: #{tpu_custom_call.1} parent=1 // pred_region
      %36 = dma.done [#allocation3], 2048
    $region13: #{tpu_custom_call.1} parent=1 // pred_fallthru
      _
    // Predicated region
    $region14: #{tpu_custom_call.1} parent=1 // pred_check
      _
    $region15: #{tpu_custom_call.1} parent=1 // pred_check_branch
      %38 = sbr.rel (0) target = $region17
    $region16: #{tpu_custom_call.1} parent=1 // pred_region
      %39 = dma.done [#allocation6], 2048
    $region17: #{tpu_custom_call.1} parent=1 // pred_fallthru
      _
    %v40 = vld [vmem:[#allocation2] sm:$0xff]
    %v41 = vld [vmem:[#allocation2 + $0x8] sm:$0xff]
    %v42 = vld [vmem:[#allocation2 + $0x10] sm:$0xff]
    %v43 = vld [vmem:[#allocation2 + $0x18] sm:$0xff]
    %v44 = vld [vmem:[#allocation2 + $0x20] sm:$0xff]
    %v45 = vld [vmem:[#allocation2 + $0x28] sm:$0xff]
    %v46 = vld [vmem:[#allocation2 + $0x30] sm:$0xff]
    %v47 = vld [vmem:[#allocation2 + $0x38] sm:$0xff]
    %v48 = vld [vmem:[#allocation2 + $0x40] sm:$0xff]
    %v49 = vld [vmem:[#allocation2 + $0x48] sm:$0xff]
    %v50 = vld [vmem:[#allocation2 + $0x50] sm:$0xff]
    %v51 = vld [vmem:[#allocation2 + $0x58] sm:$0xff]
    %v52 = vld [vmem:[#allocation2 + $0x60] sm:$0xff]
    %v53 = vld [vmem:[#allocation2 + $0x68] sm:$0xff]
    %v54 = vld [vmem:[#allocation2 + $0x70] sm:$0xff]
    %v55 = vld [vmem:[#allocation2 + $0x78] sm:$0xff]
    %v56 = vld [vmem:[#allocation5] sm:$0xff]
    %v57 = vld [vmem:[#allocation5 + $0x8] sm:$0xff]
    %v58 = vld [vmem:[#allocation5 + $0x10] sm:$0xff]
    %v59 = vld [vmem:[#allocation5 + $0x18] sm:$0xff]
    %v60 = vld [vmem:[#allocation5 + $0x20] sm:$0xff]
    %v61 = vld [vmem:[#allocation5 + $0x28] sm:$0xff]
    %v62 = vld [vmem:[#allocation5 + $0x30] sm:$0xff]
    %v63 = vld [vmem:[#allocation5 + $0x38] sm:$0xff]
    %v64 = vld [vmem:[#allocation5 + $0x40] sm:$0xff]
    %v65 = vld [vmem:[#allocation5 + $0x48] sm:$0xff]
    %v66 = vld [vmem:[#allocation5 + $0x50] sm:$0xff]
    %v67 = vld [vmem:[#allocation5 + $0x58] sm:$0xff]
    %v68 = vld [vmem:[#allocation5 + $0x60] sm:$0xff]
    %v69 = vld [vmem:[#allocation5 + $0x68] sm:$0xff]
    %v70 = vld [vmem:[#allocation5 + $0x70] sm:$0xff]
    %v71 = vld [vmem:[#allocation5 + $0x78] sm:$0xff]
    %v72 = vsub.f32 %v40, %v56
    %v73 = vsub.f32 %v41, %v57
    %v74 = vsub.f32 %v42, %v58
    %v75 = vsub.f32 %v43, %v59
    %v76 = vsub.f32 %v44, %v60
    %v77 = vsub.f32 %v45, %v61
    %v78 = vsub.f32 %v46, %v62
    %v79 = vsub.f32 %v47, %v63
    %v80 = vsub.f32 %v48, %v64
    %v81 = vsub.f32 %v49, %v65
    %v82 = vsub.f32 %v50, %v66
    %v83 = vsub.f32 %v51, %v67
    %v84 = vsub.f32 %v52, %v68
    %v85 = vsub.f32 %v53, %v69
    %v86 = vsub.f32 %v54, %v70
    %v87 = vsub.f32 %v55, %v71
    %v88 = vand.u32 2147483647, %v72
    %v89 = vand.u32 2147483647, %v73
    %v90 = vand.u32 2147483647, %v74
    %v91 = vand.u32 2147483647, %v75
    %v92 = vand.u32 2147483647, %v76
    %v93 = vand.u32 2147483647, %v77
    %v94 = vand.u32 2147483647, %v78
    %v95 = vand.u32 2147483647, %v79
    %v96 = vand.u32 2147483647, %v80
    %v97 = vand.u32 2147483647, %v81
    %v98 = vand.u32 2147483647, %v82
    %v99 = vand.u32 2147483647, %v83
    %v100 = vand.u32 2147483647, %v84
    %v101 = vand.u32 2147483647, %v85
    %v102 = vand.u32 2147483647, %v86
    %v103 = vand.u32 2147483647, %v87
    %v104 = vadd.f32 %v88, %v96
    %v105 = vadd.f32 %v89, %v97
    %v106 = vadd.f32 %v90, %v98
    %v107 = vadd.f32 %v91, %v99
    %v108 = vadd.f32 %v92, %v100
    %v109 = vadd.f32 %v93, %v101
    %v110 = vadd.f32 %v94, %v102
    %v111 = vadd.f32 %v95, %v103
    %v112 = vadd.f32 %v104, %v105
    %v113 = vadd.f32 %v112, %v106
    %v114 = vadd.f32 %v113, %v107
    %v115 = vadd.f32 %v114, %v108
    %v116 = vadd.f32 %v115, %v109
    %v117 = vadd.f32 %v116, %v110
    %v118 = vadd.f32 %v117, %v111
    %119 = vst [vmem:[#allocation7] sm:$0xff] %v118
    // Predicated region
    $region18: #{tpu_custom_call.1} parent=1 // pred_check
      _
    $region19: #{tpu_custom_call.1} parent=1 // pred_check_branch
      %121 = sbr.rel (0) target = $region21
    $region20: #{tpu_custom_call.1} parent=1 // pred_region
      %s123 = ssub.s32 128, 128
      %124 = vsyncadd [#allocation4], %s123
      %s126 = sshll.u32 [#allocation7], 4
      %s127 = int_to_ptr.vmem [resolvable:$true] %s126
      %129 = dma.vmem_to_hbm [thread:$0]  %s127, 128, %s2, [#allocation4]
    $region21: #{tpu_custom_call.1} parent=1 // pred_fallthru
      _
    // Predicated region
    $region22: #{tpu_custom_call.1} parent=1 // pred_check
      _
    $region23: #{tpu_custom_call.1} parent=1 // pred_check_branch
      %131 = sbr.rel (0) target = $region25
    $region24: #{tpu_custom_call.1} parent=1 // pred_region
      %132 = dma.done [#allocation4], 128
    $region25: #{tpu_custom_call.1} parent=1 // pred_fallthru
      _
    %133 = vsyncpa [#allocation3], 1
    %134 = vsyncpa [#allocation6], 1
    %135 = vsyncpa [#allocation4], 1

</llo_original>
